<compile_context>
chip_gen: v6e
topology: v6e:2x2x1
jax: 0.10.0
libtpu: 0.0.40
codegen_flags: <defaults>
</compile_context>

<pallas_src>
import functools

import jax
import jax.numpy as jnp
from jax.experimental import pallas as pl
from jax.experimental.pallas import tpu as pltpu

LANE = 128
_ACC_W = 512                      # accumulator lane width (steady-state VPU tile)
_BLOCK_BUDGET_BYTES = 6 * 1024 * 1024   # per pipelined input block (x2 buffers)
_TR_CAP = 32768                   # cap on lanes per tile (bounds in-kernel unroll)
_VMEM_LIMIT = 32 * 1024 * 1024    # safe on v5e/v6e (128 MiB) and v7x (64 MiB)


# ----------------------------------------------------------------------------
# Single-block path: whole (rows, R) slab fits in one tile. Full-extent block
# (always layout-legal), no masking, one cross-lane reduce.
# ----------------------------------------------------------------------------
def _single_block_kernel(x_ref, min_ref, max_ref):
    blk = x_ref[...]
    min_ref[...] = blk.min(axis=1, keepdims=True).astype(jnp.float32)
    max_ref[...] = blk.max(axis=1, keepdims=True).astype(jnp.float32)


def _minmax_single_block(x2d):
    rows, r_eff = x2d.shape
    mn, mx = pl.pallas_call(
        _single_block_kernel,
        out_shape=(
            jax.ShapeDtypeStruct((rows, 1), jnp.float32),
            jax.ShapeDtypeStruct((rows, 1), jnp.float32),
        ),
        grid_spec=pltpu.PrefetchScalarGridSpec(
            num_scalar_prefetch=0,
            grid=(1,),
            in_specs=[pl.BlockSpec((rows, r_eff), lambda i: (0, 0))],
            out_specs=[
                pl.BlockSpec((rows, 1), lambda i: (0, 0)),
                pl.BlockSpec((rows, 1), lambda i: (0, 0)),
            ],
        ),
        compiler_params=pltpu.CompilerParams(
            dimension_semantics=("arbitrary",),
            vmem_limit_bytes=_VMEM_LIMIT,
        ),
    )(x2d)
    return mn[:, 0], mx[:, 0]


# ----------------------------------------------------------------------------
# Tiled path: grid = (parts, steps). Resident (1, rows, acc_w) f32 accumulators
# (the outputs) are updated with element-wise min/max over static acc_w-wide
# lane slices of each tile. Ragged / out-of-range tiles are masked with an
# iota compare under pl.when (fast unmasked path for full tiles).
# ----------------------------------------------------------------------------
def _tiled_kernel(x_ref, min_ref, max_ref, *, tr, acc_w, r_valid, need_mask):
    p = pl.program_id(0)
    r = pl.program_id(1)
    spp = pl.num_programs(1)

    @pl.when(r == 0)
    def _init():
        min_ref[...] = jnp.full(min_ref.shape, jnp.inf, jnp.float32)
        max_ref[...] = jnp.full(max_ref.shape, -jnp.inf, jnp.float32)

    rows = x_ref.shape[0]
    n_slices = tr // acc_w
    base = (p * spp + r) * tr   # logical column offset of this tile

    def _update(masked):
        mn = min_ref[0]
        mx = max_ref[0]
        lane = None
        if masked:
            lane = jax.lax.broadcasted_iota(jnp.int32, (rows, acc_w), 1)
        for j in range(n_slices):
            blk = x_ref[:, j * acc_w:(j + 1) * acc_w].astype(jnp.float32)
            if masked:
                valid = (base + j * acc_w) + lane < r_valid
                mn = jnp.minimum(mn, jnp.where(valid, blk, jnp.inf))
                mx = jnp.maximum(mx, jnp.where(valid, blk, -jnp.inf))
            else:
                mn = jnp.minimum(mn, blk)
                mx = jnp.maximum(mx, blk)
        min_ref[0] = mn
        max_ref[0] = mx

    if not need_mask:
        _update(masked=False)
    else:
        is_full = (base + tr) <= r_valid

        @pl.when(is_full)
        def _fast():
            _update(masked=False)

        @pl.when(jnp.logical_not(is_full))
        def _masked():
            _update(masked=True)


def _minmax_tiled(x2d, tr, acc_w):
    rows, r_eff = x2d.shape
    n_blocks = -(-r_eff // tr)
    n_parts = 2 if n_blocks >= 2 else 1        # split R across 2 TCs on v7x
    spp = -(-n_blocks // n_parts)              # grid steps per part
    clamp = (n_parts * spp != n_blocks)
    need_mask = (r_eff % tr != 0) or clamp

    def in_map(p, r):
        idx = p * spp + r
        if clamp:
            idx = jnp.minimum(idx, n_blocks - 1)   # duplicate block, fully masked
        return (0, idx)

    kernel = functools.partial(
        _tiled_kernel, tr=tr, acc_w=acc_w, r_valid=r_eff, need_mask=need_mask)

    mn, mx = pl.pallas_call(
        kernel,
        out_shape=(
            jax.ShapeDtypeStruct((n_parts, rows, acc_w), jnp.float32),
            jax.ShapeDtypeStruct((n_parts, rows, acc_w), jnp.float32),
        ),
        grid_spec=pltpu.PrefetchScalarGridSpec(
            num_scalar_prefetch=0,
            grid=(n_parts, spp),
            in_specs=[pl.BlockSpec((rows, tr), in_map)],
            out_specs=[
                pl.BlockSpec((1, rows, acc_w), lambda p, r: (p, 0, 0)),
                pl.BlockSpec((1, rows, acc_w), lambda p, r: (p, 0, 0)),
            ],
        ),
        compiler_params=pltpu.CompilerParams(
            dimension_semantics=("parallel", "arbitrary"),
            vmem_limit_bytes=_VMEM_LIMIT,
        ),
    )(x2d)
    # Tiny cross-lane / cross-part reduce in the wrapper.
    return mn.min(axis=(0, 2)), mx.max(axis=(0, 2))


# ----------------------------------------------------------------------------
# Wrapper: fold small channel counts into sublanes, pick tile width from a
# VMEM budget, dispatch to the single-block or tiled kernel.
# ----------------------------------------------------------------------------
def _per_channel_minmax_2d(x2d):
    C, R = x2d.shape
    esize = jnp.dtype(x2d.dtype).itemsize

    # Fold long rows into unused sublanes when the channel count is small.
    fold = 1
    if C < 8:
        for cand in (8, 4, 2):
            if R % cand == 0 and C * cand <= 64:
                fold = cand
                break
    rows = C * fold
    r_eff = R // fold
    if fold > 1:
        x2d = x2d.reshape(rows, r_eff)   # free row-major reshape

    # Tile width: big enough to amortize per-step overhead, small enough for
    # double-buffered VMEM residency on every TPU generation.
    acc_target = _ACC_W if rows <= 1024 else LANE
    tr = _BLOCK_BUDGET_BYTES // max(1, rows * esize)
    tr = min(tr, _TR_CAP)
    tr = max(LANE, (tr // LANE) * LANE)
    if tr >= acc_target:
        tr = (tr // acc_target) * acc_target
        acc_w = acc_target
    else:
        acc_w = tr

    if r_eff <= tr:
        mn, mx = _minmax_single_block(x2d)
    else:
        mn, mx = _minmax_tiled(x2d, tr, acc_w)

    if fold > 1:
        mn = mn.reshape(C, fold).min(axis=1)
        mx = mx.reshape(C, fold).max(axis=1)
    return mn, mx


class PerChannelMinMaxObserverS:
    """JAX/Pallas port of PerChannelMinMaxObserver_S (forward pass).

    Note: like the PyTorch '_S' variant, min_vals/max_vals are overwritten
    (not combined with previous values) on every call.
    """

    def __init__(self, ch_axis=0):
        self.ch_axis = ch_axis
        # buffers start empty, like register_buffer(torch.tensor([]))
        self.min_vals = jnp.zeros((0,), jnp.float32)
        self.max_vals = jnp.zeros((0,), jnp.float32)

    def __call__(self, x):
        ndim = x.ndim
        if self.ch_axis != 0:
            # TODO(synk): tile the original layout directly for ch_axis != 0 to
            # avoid this materialized transpose (extra HBM read+write of x).
            perm = list(range(ndim))
            perm[self.ch_axis], perm[0] = perm[0], perm[self.ch_axis]
            y = jnp.transpose(x, perm)
        else:
            y = x
        C = y.shape[0] if ndim > 0 else 0
        y2d = y.reshape(C, -1)
        R = y2d.shape[1]

        if C == 0 or R == 0:
            # PyTorch would error on an empty reduce; keep empty buffers instead.
            self.min_vals = jnp.zeros((C,), x.dtype)
            self.max_vals = jnp.zeros((C,), x.dtype)
            return x

        mn, mx = _per_channel_minmax_2d(y2d)
        self.min_vals = mn.astype(x.dtype)
        self.max_vals = mx.astype(x.dtype)
        return x  # forward returns x_orig unchanged


if __name__ == "__main__":
    key = jax.random.PRNGKey(0)
    k1, k2 = jax.random.split(key)

    # Small NCHW conv-style input; module default ch_axis=0.
    x = jax.random.normal(k1, (2, 4, 16, 16), dtype=jnp.float32)
    obs = PerChannelMinMaxObserverS(ch_axis=0)
    out = jax.block_until_ready(obs(x))
    min_vals = jax.block_until_ready(obs.min_vals)
    max_vals = jax.block_until_ready(obs.max_vals)

    ref = x.reshape(x.shape[0], -1)
    assert jnp.allclose(min_vals, ref.min(axis=1)), (min_vals, ref.min(axis=1))
    assert jnp.allclose(max_vals, ref.max(axis=1)), (max_vals, ref.max(axis=1))
    assert jnp.array_equal(out, x)

    # Larger ragged bf16 input: exercises the tiled / masked / two-part path
    # with native-dtype DMA.
    x2 = jax.random.normal(k2, (16, 70000), dtype=jnp.float32).astype(jnp.bfloat16)
    obs2 = PerChannelMinMaxObserverS(ch_axis=0)
    jax.block_until_ready(obs2(x2))
    mn2 = jax.block_until_ready(obs2.min_vals)
    mx2 = jax.block_until_ready(obs2.max_vals)
    assert jnp.allclose(mn2.astype(jnp.float32), x2.min(axis=1).astype(jnp.float32))
    assert jnp.allclose(mx2.astype(jnp.float32), x2.max(axis=1).astype(jnp.float32))

    print("KERNEL_OK")
</pallas_src>

<mosaic_0001>
module attributes {stable_mosaic.version = 11 : i64} {
  func.func @_single_block_kernel(%arg0: i32, %arg1: memref<16x128xf32, #tpu.memory_space<vmem>>, %arg2: memref<16x1xf32, #tpu.memory_space<vmem>>, %arg3: memref<16x1xf32, #tpu.memory_space<vmem>>) attributes {dimension_semantics = [#tpu.dimension_semantics<arbitrary>], iteration_bounds = array<i64: 1>, scalar_prefetch = 0 : i64, scratch_operands = 0 : i64, tpu.core_type = #tpu.core_type<tc>, window_params = [{pipeline_mode = #tpu.pipeline_mode<synchronous>, transform_indices = @transform_0, window_bounds = array<i64: 16, 128>}, {pipeline_mode = #tpu.pipeline_mode<synchronous>, transform_indices = @transform_1, window_bounds = array<i64: 16, 1>}, {pipeline_mode = #tpu.pipeline_mode<synchronous>, transform_indices = @transform_2, window_bounds = array<i64: 16, 1>}]} {
    %c0 = arith.constant 0 : index
    %c0_0 = arith.constant 0 : index
    %0 = vector.load %arg1[%c0, %c0_0] : memref<16x128xf32, #tpu.memory_space<vmem>>, vector<16x128xf32>
    %cst = arith.constant dense<0x7F800000> : vector<16xf32>
    %1 = vector.multi_reduction <minimumf>, %0, %cst [1] : vector<16x128xf32> to vector<16xf32>
    %2 = vector.shape_cast %1 : vector<16xf32> to vector<16x1xf32>
    %c0_1 = arith.constant 0 : index
    %c0_2 = arith.constant 0 : index
    %3 = vector.load %arg2[%c0_1, %c0_2] : memref<16x1xf32, #tpu.memory_space<vmem>>, vector<16x1xf32>
    tpu.vector_store %arg2[%c0_1, %c0_2], %2 {strides = array<i32>} : memref<16x1xf32, #tpu.memory_space<vmem>>, vector<16x1xf32>,
    %cst_3 = arith.constant dense<0xFF800000> : vector<16xf32>
    %4 = vector.multi_reduction <maximumf>, %0, %cst_3 [1] : vector<16x128xf32> to vector<16xf32>
    %5 = vector.shape_cast %4 : vector<16xf32> to vector<16x1xf32>
    %c0_4 = arith.constant 0 : index
    %c0_5 = arith.constant 0 : index
    %6 = vector.load %arg3[%c0_4, %c0_5] : memref<16x1xf32, #tpu.memory_space<vmem>>, vector<16x1xf32>
    tpu.vector_store %arg3[%c0_4, %c0_5], %5 {strides = array<i32>} : memref<16x1xf32, #tpu.memory_space<vmem>>, vector<16x1xf32>,
    return
  }
  func.func @transform_0(%arg0: i32) -> (i32, i32) {
    %c0_i32 = arith.constant 0 : i32
    %c0_i32_0 = arith.constant 0 : i32
    %c0_i32_1 = arith.constant 0 : i32
    return %c0_i32, %c0_i32_0 : i32, i32
  }
  func.func @transform_1(%arg0: i32) -> (i32, i32) {
    %c0_i32 = arith.constant 0 : i32
    %c0_i32_0 = arith.constant 0 : i32
    %c0_i32_1 = arith.constant 0 : i32
    return %c0_i32, %c0_i32_0 : i32, i32
  }
  func.func @transform_2(%arg0: i32) -> (i32, i32) {
    %c0_i32 = arith.constant 0 : i32
    %c0_i32_0 = arith.constant 0 : i32
    %c0_i32_1 = arith.constant 0 : i32
    return %c0_i32, %c0_i32_0 : i32, i32
  }
}

</mosaic_0001>

<llo_original>
// kernel: tpu_custom_call.1
$region0: #{tpu_custom_call.1}
  #allocation0 [shape = 'u32[]', space=smem, size = 0x4, offset = 0x4, fixed_abs, tag = 'smem constant byte address 0x4 - core index']
  #allocation1 [shape = 'u32[144,128]{1,0:T(1,128)}', space=vmem, size = 0x12000, scoped, tag = 'internal scratch']
  %s0 = inlined_call_operand.hbm [shape: f32[16,128], index: 0, kind: input, shape index: {}]
  %s1 = inlined_call_operand.vmem [shape: f32[16,1], index: 1, kind: output, shape index: {0}]
  %s2 = inlined_call_operand.vmem [shape: f32[16,1], index: 2, kind: output, shape index: {1}]
  %3 = xla_tuple %s1, %s2
  %s4 = sld [smem:[#allocation0]]
  $region26: #{tpu_custom_call.1} parent=0
    _
  %s6 = ssub.s32 1, %s4
  %s7 = scalar_select 0, %s6, %s4
  $region1: #{tpu_custom_call.1} parent=0
    #allocation2 [shape = 'u8[8192]{0}', space=vmem, size = 0x2000, scoped, tag = 'input window, operand 0, single buffered']
    #allocation3 [shape = 's32[1]{0}', space=sflag, size = 0x4, scoped, tag = 'scoped memory for tpu_custom_call.1']
    %8 = vsyncpa [#allocation3], 0
    // Predicated region
    $region2: #{tpu_custom_call.1} parent=1 // pred_check
      _
    $region3: #{tpu_custom_call.1} parent=1 // pred_check_branch
      %10 = sbr.rel (0) target = $region5
    $region4: #{tpu_custom_call.1} parent=1 // pred_region
      %s12 = ssub.s32 256, 256
      %13 = vsyncadd [#allocation3], %s12
      %s14 = sshll.u32 [#allocation2], 4
      %s15 = int_to_ptr.vmem [resolvable:$true] %s14
      %20 = dma.hbm_to_vmem [thread:$0]  %s0, 256, %s15, [#allocation3], 128, 128, 8
    $region5: #{tpu_custom_call.1} parent=1 // pred_fallthru
      _
    // Predicated region
    $region6: #{tpu_custom_call.1} parent=1 // pred_check
      _
    $region7: #{tpu_custom_call.1} parent=1 // pred_check_branch
      %22 = sbr.rel (0) target = $region9
    $region8: #{tpu_custom_call.1} parent=1 // pred_region
      %23 = dma.done [#allocation3], 256
    $region9: #{tpu_custom_call.1} parent=1 // pred_fallthru
      _
    %v24 = vld [vmem:[#allocation2] sm:$0xff]
    %v25 = vld [vmem:[#allocation2 + $0x8] sm:$0xff]
    %26 = vmin.xlane.f32.xlu0 %v24
    %v27 = vpop.xlane.xlu0 %26
    %28 = vmin.xlane.f32.xlu0 %v25
    %v29 = vpop.xlane.xlu0 %28
    %vm30 = vcmask 7168
    %31 = vst.msk [vmem:[%s1] sm:$0xff] %vm30, %v27
    %32 = vst.msk [vmem:[%s1 + $0x8] sm:$0xff] %vm30, %v29
    %33 = vmax.xlane.f32.xlu0 %v24
    %v34 = vpop.xlane.xlu0 %33
    %35 = vmax.xlane.f32.xlu0 %v25
    %v36 = vpop.xlane.xlu0 %35
    %37 = vst.msk [vmem:[%s2] sm:$0xff] %vm30, %v34
    %38 = vst.msk [vmem:[%s2 + $0x8] sm:$0xff] %vm30, %v36
    // Predicated region
    $region10: #{tpu_custom_call.1} parent=1 // pred_check
      _
    $region11: #{tpu_custom_call.1} parent=1 // pred_check_branch
      %40 = sbr.rel (0) target = $region13
    $region12: #{tpu_custom_call.1} parent=1 // pred_region
      _
    $region13: #{tpu_custom_call.1} parent=1 // pred_fallthru
      _
    // Predicated region
    $region14: #{tpu_custom_call.1} parent=1 // pred_check
      _
    $region15: #{tpu_custom_call.1} parent=1 // pred_check_branch
      %42 = sbr.rel (0) target = $region17
    $region16: #{tpu_custom_call.1} parent=1 // pred_region
      _
    $region17: #{tpu_custom_call.1} parent=1 // pred_fallthru
      _
    // Predicated region
    $region18: #{tpu_custom_call.1} parent=1 // pred_check
      _
    $region19: #{tpu_custom_call.1} parent=1 // pred_check_branch
      %44 = sbr.rel (0) target = $region21
    $region20: #{tpu_custom_call.1} parent=1 // pred_region
      _
    $region21: #{tpu_custom_call.1} parent=1 // pred_fallthru
      _
    // Predicated region
    $region22: #{tpu_custom_call.1} parent=1 // pred_check
      _
    $region23: #{tpu_custom_call.1} parent=1 // pred_check_branch
      %46 = sbr.rel (0) target = $region25
    $region24: #{tpu_custom_call.1} parent=1 // pred_region
      _
    $region25: #{tpu_custom_call.1} parent=1 // pred_fallthru
      _
    %47 = vsyncpa [#allocation3], 1

</llo_original>
